<compile_context>
chip_gen: v7x
topology: tpu7x:2x2x1
jax: 0.10.0
libtpu: 0.0.40
codegen_flags: <defaults>
</compile_context>

<pallas_src>
import jax
import jax.numpy as jnp
import numpy as np
from jax.experimental import pallas as pl
from jax.experimental.pallas import tpu as pltpu

IN_DIM = 26
HID_DIM = 256
OUT_DIM = 6
N_PAD = 128          # padded MXU output width for the 2nd matmul (VMEM-only)
MAX_BLOCK_B = 2048   # batch tile cap (few MiB of VMEM even with f32 temps)


def _round_up(v, m):
    return ((v + m - 1) // m) * m


def actor_kernel(x_ref, w1_ref, b1_ref, w2_ref, b2_ref, mu_ref):
    # Hidden layer: (tB, 26)bf16 @ (26, 256)bf16 -> f32 acc (Mosaic zero-pads
    # the K=26 contraction internally; padding with zeros is exact), +b, ReLU.
    h = jnp.dot(x_ref[...], w1_ref[...], preferred_element_type=jnp.float32)
    h = jnp.maximum(h + b1_ref[...], 0.0)
    # Output layer: (tB, 256)bf16 @ (256, 128)bf16 -> f32; only the first 6
    # columns are real.  Slice before the store so HBM writeback is 6 lanes.
    mu_full = jnp.dot(h.astype(w2_ref.dtype), w2_ref[...],
                      preferred_element_type=jnp.float32)
    mu_ref[...] = (mu_full[:, :OUT_DIM] + b2_ref[...]).astype(mu_ref.dtype)


def prepare_params(w1, b1, w2, b2):
    """One-time layout prep: bf16 weights; only w2's output dim is padded
    (weights are tiny, VMEM-resident, fetched once per call)."""
    w1p = w1.astype(jnp.bfloat16)                                  # (26, 256)
    w2p = (jnp.zeros((HID_DIM, N_PAD), jnp.float32)
           .at[:, :OUT_DIM].set(w2).astype(jnp.bfloat16))          # (256, 128)
    b1p = b1.reshape(1, HID_DIM).astype(jnp.float32)
    b2p = b2.reshape(1, OUT_DIM).astype(jnp.float32)
    return w1p, b1p, w2p, b2p


@jax.jit
def actor_forward(x, params, sigma):
    """x: (B, 26) float. Returns (mu: (B, 6) f32, std: (6,) f32)."""
    w1p, b1p, w2p, b2p = params
    B = x.shape[0]
    std = jnp.exp(sigma)             # x-independent -> stays out of the kernel
    if B == 0:                       # empty-grid guard
        return jnp.zeros((0, OUT_DIM), jnp.float32), std

    # >=2 grid steps when B is large (shards across v7x's two TensorCores);
    # capped tile keeps per-step VMEM small on every generation.
    block_b = max(16, min(MAX_BLOCK_B, _round_up(pl.cdiv(B, 2), 16)))
    B_pad = _round_up(B, block_b)
    grid = (B_pad // block_b,)

    # Only the batch axis is padded; K stays at 26 (full-dim block), so the
    # kernel DMAs 52 B/row of input instead of a 128-lane slab.
    xp = x.astype(jnp.bfloat16)
    if B_pad != B:
        xp = jnp.pad(xp, ((0, B_pad - B), (0, 0)))

    mu_pad = pl.pallas_call(
        actor_kernel,
        out_shape=jax.ShapeDtypeStruct((B_pad, OUT_DIM), jnp.float32),
        grid=grid,
        in_specs=[
            pl.BlockSpec((block_b, IN_DIM), lambda i: (i, 0)),
            pl.BlockSpec((IN_DIM, HID_DIM), lambda i: (0, 0)),
            pl.BlockSpec((1, HID_DIM), lambda i: (0, 0)),
            pl.BlockSpec((HID_DIM, N_PAD), lambda i: (0, 0)),
            pl.BlockSpec((1, OUT_DIM), lambda i: (0, 0)),
        ],
        out_specs=pl.BlockSpec((block_b, OUT_DIM), lambda i: (i, 0)),
        compiler_params=pltpu.CompilerParams(
            dimension_semantics=("parallel",)),
    )(xp, w1p, b1p, w2p, b2p)

    # Padded rows of mu_pad are NOT meaningful (zero rows give relu(b1)@w2+b2);
    # always slice back to B here.
    mu = mu_pad[:B]
    return mu, std


def init_params(key):
    """Deterministic init mimicking PyTorch Linear defaults U(-1/sqrt(fan_in), +)."""
    k1, k2, k3, k4 = jax.random.split(key, 4)
    bound1 = 1.0 / np.sqrt(IN_DIM)
    bound2 = 1.0 / np.sqrt(HID_DIM)
    w1 = jax.random.uniform(k1, (IN_DIM, HID_DIM), jnp.float32, -bound1, bound1)
    b1 = jax.random.uniform(k2, (HID_DIM,), jnp.float32, -bound1, bound1)
    w2 = jax.random.uniform(k3, (HID_DIM, OUT_DIM), jnp.float32, -bound2, bound2)
    b2 = jax.random.uniform(k4, (OUT_DIM,), jnp.float32, -bound2, bound2)
    sigma = jnp.zeros((OUT_DIM,), jnp.float32)   # nn.Parameter(torch.zeros(6))
    return w1, b1, w2, b2, sigma


if __name__ == "__main__":
    key = jax.random.PRNGKey(0)
    kx, kp = jax.random.split(key)
    B = 8
    x = jax.random.normal(kx, (B, IN_DIM), jnp.float32)
    w1, b1, w2, b2, sigma = init_params(kp)
    params = prepare_params(w1, b1, w2, b2)

    mu, std = actor_forward(x, params, sigma)
    jax.block_until_ready((mu, std))
    assert mu.shape == (B, OUT_DIM) and std.shape == (OUT_DIM,)

    hp = jax.lax.Precision.HIGHEST
    # Reference mirroring the kernel's bf16 rounding of x / w / h.
    w1b = params[0].astype(jnp.float32)
    w2b = params[2][:, :OUT_DIM].astype(jnp.float32)
    xb = x.astype(jnp.bfloat16).astype(jnp.float32)
    h_ref = jnp.maximum(jnp.dot(xb, w1b, precision=hp) + b1, 0.0)
    mu_ref = jnp.dot(h_ref.astype(jnp.bfloat16).astype(jnp.float32), w2b,
                     precision=hp) + b2
    std_ref = jnp.exp(sigma)
    np.testing.assert_allclose(np.asarray(mu), np.asarray(mu_ref),
                               rtol=1e-4, atol=1e-4)
    np.testing.assert_allclose(np.asarray(std), np.asarray(std_ref),
                               rtol=1e-6, atol=1e-6)

    # Loose check against the pure-f32 PyTorch-semantic forward.
    h_f32 = jnp.maximum(jnp.dot(x, w1, precision=hp) + b1, 0.0)
    mu_f32 = jnp.dot(h_f32, w2, precision=hp) + b2
    np.testing.assert_allclose(np.asarray(mu), np.asarray(mu_f32),
                               rtol=5e-2, atol=5e-2)

    # Exercise a multi-step grid + batch-padding path once (B=300 -> grid=(2,)).
    B2 = 300
    x2 = jax.random.normal(kx, (B2, IN_DIM), jnp.float32)
    mu2, std2 = actor_forward(x2, params, sigma)
    jax.block_until_ready((mu2, std2))
    assert mu2.shape == (B2, OUT_DIM) and std2.shape == (OUT_DIM,)
    h2 = jnp.maximum(jnp.dot(x2, w1, precision=hp) + b1, 0.0)
    mu2_f32 = jnp.dot(h2, w2, precision=hp) + b2
    np.testing.assert_allclose(np.asarray(mu2), np.asarray(mu2_f32),
                               rtol=5e-2, atol=5e-2)

    print("KERNEL_OK")
</pallas_src>

<mosaic_0001>
module attributes {stable_mosaic.version = 11 : i64} {
  func.func @actor_kernel(%arg0: i32, %arg1: memref<16x26xbf16, #tpu.memory_space<vmem>>, %arg2: memref<26x256xbf16, #tpu.memory_space<vmem>>, %arg3: memref<1x256xf32, #tpu.memory_space<vmem>>, %arg4: memref<256x128xbf16, #tpu.memory_space<vmem>>, %arg5: memref<1x6xf32, #tpu.memory_space<vmem>>, %arg6: memref<16x6xf32, #tpu.memory_space<vmem>>) attributes {dimension_semantics = [#tpu.dimension_semantics<parallel>], iteration_bounds = array<i64: 1>, scalar_prefetch = 0 : i64, scratch_operands = 0 : i64, tpu.core_type = #tpu.core_type<tc>, window_params = [{transform_indices = @transform_0, window_bounds = array<i64: 16, 26>}, {pipeline_mode = #tpu.pipeline_mode<synchronous>, transform_indices = @transform_1, window_bounds = array<i64: 26, 256>}, {pipeline_mode = #tpu.pipeline_mode<synchronous>, transform_indices = @transform_2, window_bounds = array<i64: 1, 256>}, {pipeline_mode = #tpu.pipeline_mode<synchronous>, transform_indices = @transform_3, window_bounds = array<i64: 256, 128>}, {pipeline_mode = #tpu.pipeline_mode<synchronous>, transform_indices = @transform_4, window_bounds = array<i64: 1, 6>}, {transform_indices = @transform_5, window_bounds = array<i64: 16, 6>}]} {
    %c0 = arith.constant 0 : index
    %c0_0 = arith.constant 0 : index
    %0 = vector.load %arg1[%c0, %c0_0] : memref<16x26xbf16, #tpu.memory_space<vmem>>, vector<16x26xbf16>
    %c0_1 = arith.constant 0 : index
    %c0_2 = arith.constant 0 : index
    %1 = vector.load %arg2[%c0_1, %c0_2] : memref<26x256xbf16, #tpu.memory_space<vmem>>, vector<26x256xbf16>
    %cst = arith.constant dense<0.000000e+00> : vector<16x256xf32>
    %2 = tpu.matmul %0, %1, %cst {dimension_numbers = #tpu.dot_dimension_numbers<[1], [0], [0], [1], [0, 0, 1, 1], [], []>} : vector<16x26xbf16>, vector<26x256xbf16>, vector<16x256xf32> -> vector<16x256xf32>
    %c0_3 = arith.constant 0 : index
    %c0_4 = arith.constant 0 : index
    %3 = vector.load %arg3[%c0_3, %c0_4] : memref<1x256xf32, #tpu.memory_space<vmem>>, vector<1x256xf32>
    %4 = vector.broadcast %3 : vector<1x256xf32> to vector<16x256xf32>
    %5 = arith.addf %2, %4 : vector<16x256xf32>
    %cst_5 = arith.constant 0.000000e+00 : f32
    %6 = vector.broadcast %cst_5 : f32 to vector<16x256xf32>
    %7 = arith.maximumf %5, %6 : vector<16x256xf32>
    %8 = arith.truncf %7 : vector<16x256xf32> to vector<16x256xbf16>
    %c0_6 = arith.constant 0 : index
    %c0_7 = arith.constant 0 : index
    %9 = vector.load %arg4[%c0_6, %c0_7] : memref<256x128xbf16, #tpu.memory_space<vmem>>, vector<256x128xbf16>
    %cst_8 = arith.constant dense<0.000000e+00> : vector<16x128xf32>
    %10 = tpu.matmul %8, %9, %cst_8 {dimension_numbers = #tpu.dot_dimension_numbers<[1], [0], [0], [1], [0, 0, 1, 1], [], []>} : vector<16x256xbf16>, vector<256x128xbf16>, vector<16x128xf32> -> vector<16x128xf32>
    %11 = vector.extract_strided_slice %10 {offsets = [0, 0], sizes = [16, 6], strides = [1, 1]} : vector<16x128xf32> to vector<16x6xf32>
    %c0_9 = arith.constant 0 : index
    %c0_10 = arith.constant 0 : index
    %12 = vector.load %arg5[%c0_9, %c0_10] : memref<1x6xf32, #tpu.memory_space<vmem>>, vector<1x6xf32>
    %13 = vector.broadcast %12 : vector<1x6xf32> to vector<16x6xf32>
    %14 = arith.addf %11, %13 : vector<16x6xf32>
    %c0_11 = arith.constant 0 : index
    %c0_12 = arith.constant 0 : index
    %15 = vector.load %arg6[%c0_11, %c0_12] : memref<16x6xf32, #tpu.memory_space<vmem>>, vector<16x6xf32>
    tpu.vector_store %arg6[%c0_11, %c0_12], %14 {strides = array<i32>} : memref<16x6xf32, #tpu.memory_space<vmem>>, vector<16x6xf32>,
    return
  }
  func.func @transform_0(%arg0: i32) -> (i32, i32) {
    %c0_i32 = arith.constant 0 : i32
    %c0_i32_0 = arith.constant 0 : i32
    return %arg0, %c0_i32 : i32, i32
  }
  func.func @transform_1(%arg0: i32) -> (i32, i32) {
    %c0_i32 = arith.constant 0 : i32
    %c0_i32_0 = arith.constant 0 : i32
    %c0_i32_1 = arith.constant 0 : i32
    return %c0_i32, %c0_i32_0 : i32, i32
  }
  func.func @transform_2(%arg0: i32) -> (i32, i32) {
    %c0_i32 = arith.constant 0 : i32
    %c0_i32_0 = arith.constant 0 : i32
    %c0_i32_1 = arith.constant 0 : i32
    return %c0_i32, %c0_i32_0 : i32, i32
  }
  func.func @transform_3(%arg0: i32) -> (i32, i32) {
    %c0_i32 = arith.constant 0 : i32
    %c0_i32_0 = arith.constant 0 : i32
    %c0_i32_1 = arith.constant 0 : i32
    return %c0_i32, %c0_i32_0 : i32, i32
  }
  func.func @transform_4(%arg0: i32) -> (i32, i32) {
    %c0_i32 = arith.constant 0 : i32
    %c0_i32_0 = arith.constant 0 : i32
    %c0_i32_1 = arith.constant 0 : i32
    return %c0_i32, %c0_i32_0 : i32, i32
  }
  func.func @transform_5(%arg0: i32) -> (i32, i32) {
    %c0_i32 = arith.constant 0 : i32
    %c0_i32_0 = arith.constant 0 : i32
    return %arg0, %c0_i32 : i32, i32
  }
}

</mosaic_0001>

<llo_original>
// kernel: actor_forward.1
$region0: #{actor_forward.1}
  #allocation0 [shape = 'u32[]', space=smem, size = 0x4, offset = 0x4, fixed_abs, tag = 'smem constant byte address 0x4 - core index']
  #allocation1 [shape = 'u32[144,128]{1,0:T(1,128)}', space=vmem, size = 0x12000, scoped, tag = 'internal scratch']
  %s0 = inlined_call_operand.vmem [shape: bf16[16,26], index: 0, kind: input, shape index: {}]
  %s1 = inlined_call_operand.vmem [shape: bf16[26,256], index: 1, kind: input, shape index: {}]
  %s2 = inlined_call_operand.vmem [shape: f32[1,256], index: 2, kind: input, shape index: {}]
  %s3 = inlined_call_operand.hbm [shape: bf16[256,128], index: 3, kind: input, shape index: {}]
  %s4 = inlined_call_operand.vmem [shape: f32[1,6], index: 4, kind: input, shape index: {}]
  %s5 = inlined_call_operand.vmem [shape: f32[16,6], index: 5, kind: output, shape index: {}]
  %s6 = sld [smem:[#allocation0]]
  $region34: #{actor_forward.1} parent=0
    _
  %s8 = ssub.s32 1, %s6
  %s9 = scalar_select 0, %s8, %s6
  $region1: #{actor_forward.1} parent=0
    #allocation2 [shape = 'u8[65536]{0}', space=vmem, size = 0x10000, scoped, tag = 'input window, operand 3, single buffered']
    #allocation3 [shape = 's32[1]{0}', space=sflag, size = 0x4, scoped, tag = 'scoped memory for actor_forward.1']
    %10 = vsyncpa [#allocation3], 0
    // Predicated region
    $region2: #{actor_forward.1} parent=1 // pred_check
      _
    $region3: #{actor_forward.1} parent=1 // pred_check_branch
      %12 = sbr.rel (0) target = $region5
    $region4: #{actor_forward.1} parent=1 // pred_region
      _
    $region5: #{actor_forward.1} parent=1 // pred_fallthru
      _
    // Predicated region
    $region6: #{actor_forward.1} parent=1 // pred_check
      _
    $region7: #{actor_forward.1} parent=1 // pred_check_branch
      %14 = sbr.rel (0) target = $region9
    $region8: #{actor_forward.1} parent=1 // pred_region
      _
    $region9: #{actor_forward.1} parent=1 // pred_fallthru
      _
    // Predicated region
    $region10: #{actor_forward.1} parent=1 // pred_check
      _
    $region11: #{actor_forward.1} parent=1 // pred_check_branch
      %16 = sbr.rel (0) target = $region13
    $region12: #{actor_forward.1} parent=1 // pred_region
      _
    $region13: #{actor_forward.1} parent=1 // pred_fallthru
      _
    // Predicated region
    $region14: #{actor_forward.1} parent=1 // pred_check
      _
    $region15: #{actor_forward.1} parent=1 // pred_check_branch
      %18 = sbr.rel (0) target = $region17
    $region16: #{actor_forward.1} parent=1 // pred_region
      %s20 = ssub.s32 2048, 2048
      %21 = vsyncadd [#allocation3], %s20
      %s22 = sshll.u32 [#allocation2], 4
      %s23 = int_to_ptr.vmem [resolvable:$true] %s22
      %28 = dma.hbm_to_vmem [thread:$0]  %s3, 2048, %s23, [#allocation3], 64, 64, 4
    $region17: #{actor_forward.1} parent=1 // pred_fallthru
      _
    // Predicated region
    $region18: #{actor_forward.1} parent=1 // pred_check
      _
    $region19: #{actor_forward.1} parent=1 // pred_check_branch
      %30 = sbr.rel (0) target = $region21
    $region20: #{actor_forward.1} parent=1 // pred_region
      _
    $region21: #{actor_forward.1} parent=1 // pred_fallthru
      _
    // Predicated region
    $region22: #{actor_forward.1} parent=1 // pred_check
      _
    $region23: #{actor_forward.1} parent=1 // pred_check_branch
      %32 = sbr.rel (0) target = $region25
    $region24: #{actor_forward.1} parent=1 // pred_region
      %33 = dma.done [#allocation3], 2048
    $region25: #{actor_forward.1} parent=1 // pred_fallthru
      _
    %v35 = vld [vmem:[%s0] sm:$0xf]
    %v36 = vld [vmem:[%s0 + $0x4] sm:$0xf]
    %v37 = vld [vmem:[%s1] sm:$0xff]
    %v38 = vld [vmem:[%s1 + $0x8] sm:$0xff]
    %v39 = vld [vmem:[%s1 + $0x10] sm:$0xff]
    %v40 = vld [vmem:[%s1 + $0x18] sm:$0x11]
    %v41 = vld [vmem:[%s2] sm:$0x3]
    %v43 = vlaneseq
    %v44 = vshrl.u32 %v43, 7
    %v45 = vsub.s32 0, %v44
    %v46 = vrot.slane %v41, %v45
    %v47 = vlaneseq
    %v48 = vshrl.u32 %v47, 7
    %v49 = vsub.s32 1, %v48
    %v50 = vrot.slane %v41, %v49
    %v55 = vunpack.c.l.b16 %v35
    %v56 = vunpack.c.l.b16 %v36
    %v57 = vpack.c.b16 %v56, %v55
    %v62 = vunpack.c.l.b16 %v37
    %v63 = vunpack.c.h.b16 %v37
    %v64 = vunpack.c.l.b16 %v38
    %v65 = vunpack.c.h.b16 %v38
    %v66 = vunpack.c.l.b16 %v39
    %v67 = vunpack.c.h.b16 %v39
    %v68 = vunpack.c.l.b16 %v40
    %v69 = vunpack.c.h.b16 %v40
    %v70 = vpack.c.b16 %v64, %v62
    %v71 = vpack.c.b16 %v65, %v63
    %v72 = vpack.c.b16 %v68, %v66
    %v73 = vpack.c.b16 %v69, %v67
    %vm76 = vcmask 211968
    %v78 = vsel %vm76, %v57, 0
    %vm80 = vcmask 1044480
    %v82 = vsel %vm80, %v72, 0
    %v85 = vsel %vm80, %v73, 0
    %87 = vmatprep.subr.bf16.mxu0 %v71
    %88 = vmatpush1.bf16.msra.mxu0 %v70
    %89 = vmatprep.subr.bf16.mxu0 %v85
    %90 = vmatpush1.bf16.msra.mxu0 %v82
    %91 = vmatprep.subr.bf16.mxu0 0
    %92 = vmatpush1.bf16.msra.mxu0 0
    %93 = vmatprep.subr.bf16.mxu0 0
    %94 = vmatpush1.bf16.msra.mxu0 0
    %95 = vmatprep.subr.bf16.mxu0 0
    %96 = vmatpush1.bf16.msra.mxu0 0
    %97 = vmatprep.subr.bf16.mxu0 0
    %98 = vmatpush1.bf16.msra.mxu0 0
    %99 = vmatprep.subr.bf16.mxu0 0
    %100 = vmatpush1.bf16.msra.mxu0 0
    %101 = vmatprep.subr.bf16.mxu0 0
    %102 = vmatpush1.bf16.msra.mxu0 0
    %103 = vmatprep.subr.bf16.mxu0 0
    %104 = vmatpush1.bf16.msra.mxu0 0
    %105 = vmatprep.subr.bf16.mxu0 0
    %106 = vmatpush1.bf16.msra.mxu0 0
    %107 = vmatprep.subr.bf16.mxu0 0
    %108 = vmatpush1.bf16.msra.mxu0 0
    %109 = vmatprep.subr.bf16.mxu0 0
    %110 = vmatpush1.bf16.msra.mxu0 0
    %111 = vmatprep.subr.bf16.mxu0 0
    %112 = vmatpush1.bf16.msra.mxu0 0
    %113 = vmatprep.subr.bf16.mxu0 0
    %114 = vmatpush1.bf16.msra.mxu0 0
    %115 = vmatprep.subr.bf16.mxu0 0
    %116 = vmatpush1.bf16.msra.mxu0 0
    %117 = vmatprep.subr.bf16.mxu0 0
    %118 = vmatpush1.bf16.msra.mxu0 0
    %119 = vmatprep.mubr.bf16.mxu0 0
    %120 = vmatmul.mubr.bf16.gmra.mrb[0].mxu0 %v78
    %v121 = vpop.f32.mrb[0].mxu0
    %v122 = vadd.f32 %v46, %v121
    %v123 = vpop.f32.mrb[0].mxu0
    %v124 = vadd.f32 %v50, %v123
    %v125 = vpop.f32.mrb[0].mxu0
    %v126 = vadd.f32 %v46, %v125
    %v127 = vpop.f32.mrb[0].mxu0
    %v128 = vadd.f32 %v50, %v127
    %129 = vdwg.mxu0
    %v130 = vmax.f32 %v122, 0.0
    %v131 = vmax.f32 %v124, 0.0
    %v132 = vmax.f32 %v126, 0.0
    %v133 = vmax.f32 %v128, 0.0
    %v134 = vpack.c.bf16 %v132, %v130
    %v135 = vpack.c.bf16 %v133, %v131
    %v136 = vld [vmem:[#allocation2] sm:$0xf]
    %v137 = vld [vmem:[#allocation2 + $0x4] sm:$0xf]
    %v138 = vld [vmem:[#allocation2 + $0x8] sm:$0xf]
    %v139 = vld [vmem:[#allocation2 + $0xc] sm:$0xf]
    %v140 = vld [vmem:[#allocation2 + $0x10] sm:$0xf]
    %v141 = vld [vmem:[#allocation2 + $0x14] sm:$0xf]
    %v142 = vld [vmem:[#allocation2 + $0x18] sm:$0xf]
    %v143 = vld [vmem:[#allocation2 + $0x1c] sm:$0xf]
    %v144 = vld [vmem:[#allocation2 + $0x20] sm:$0xf]
    %v145 = vld [vmem:[#allocation2 + $0x24] sm:$0xf]
    %v146 = vld [vmem:[#allocation2 + $0x28] sm:$0xf]
    %v147 = vld [vmem:[#allocation2 + $0x2c] sm:$0xf]
    %v148 = vld [vmem:[#allocation2 + $0x30] sm:$0xf]
    %v149 = vld [vmem:[#allocation2 + $0x34] sm:$0xf]
    %v150 = vld [vmem:[#allocation2 + $0x38] sm:$0xf]
    %v151 = vld [vmem:[#allocation2 + $0x3c] sm:$0xf]
    %v152 = vld [vmem:[#allocation2 + $0x40] sm:$0xf]
    %v153 = vld [vmem:[#allocation2 + $0x44] sm:$0xf]
    %v154 = vld [vmem:[#allocation2 + $0x48] sm:$0xf]
    %v155 = vld [vmem:[#allocation2 + $0x4c] sm:$0xf]
    %v156 = vld [vmem:[#allocation2 + $0x50] sm:$0xf]
    %v157 = vld [vmem:[#allocation2 + $0x54] sm:$0xf]
    %v158 = vld [vmem:[#allocation2 + $0x58] sm:$0xf]
    %v159 = vld [vmem:[#allocation2 + $0x5c] sm:$0xf]
    %v160 = vld [vmem:[#allocation2 + $0x60] sm:$0xf]
    %v161 = vld [vmem:[#allocation2 + $0x64] sm:$0xf]
    %v162 = vld [vmem:[#allocation2 + $0x68] sm:$0xf]
    %v163 = vld [vmem:[#allocation2 + $0x6c] sm:$0xf]
    %v164 = vld [vmem:[#allocation2 + $0x70] sm:$0xf]
    %v165 = vld [vmem:[#allocation2 + $0x74] sm:$0xf]
    %v166 = vld [vmem:[#allocation2 + $0x78] sm:$0xf]
    %v167 = vld [vmem:[#allocation2 + $0x7c] sm:$0xf]
    %v200 = vunpack.c.l.b16 %v136
    %v201 = vunpack.c.l.b16 %v137
    %v202 = vunpack.c.l.b16 %v138
    %v203 = vunpack.c.l.b16 %v139
    %v204 = vunpack.c.l.b16 %v140
    %v205 = vunpack.c.l.b16 %v141
    %v206 = vunpack.c.l.b16 %v142
    %v207 = vunpack.c.l.b16 %v143
    %v208 = vunpack.c.l.b16 %v144
    %v209 = vunpack.c.l.b16 %v145
    %v210 = vunpack.c.l.b16 %v146
    %v211 = vunpack.c.l.b16 %v147
    %v212 = vunpack.c.l.b16 %v148
    %v213 = vunpack.c.l.b16 %v149
    %v214 = vunpack.c.l.b16 %v150
    %v215 = vunpack.c.l.b16 %v151
    %v216 = vunpack.c.l.b16 %v152
    %v217 = vunpack.c.l.b16 %v153
    %v218 = vunpack.c.l.b16 %v154
    %v219 = vunpack.c.l.b16 %v155
    %v220 = vunpack.c.l.b16 %v156
    %v221 = vunpack.c.l.b16 %v157
    %v222 = vunpack.c.l.b16 %v158
    %v223 = vunpack.c.l.b16 %v159
    %v224 = vunpack.c.l.b16 %v160
    %v225 = vunpack.c.l.b16 %v161
    %v226 = vunpack.c.l.b16 %v162
    %v227 = vunpack.c.l.b16 %v163
    %v228 = vunpack.c.l.b16 %v164
    %v229 = vunpack.c.l.b16 %v165
    %v230 = vunpack.c.l.b16 %v166
    %v231 = vunpack.c.l.b16 %v167
    %v232 = vpack.c.b16 %v201, %v200
    %v233 = vpack.c.b16 %v203, %v202
    %v234 = vpack.c.b16 %v205, %v204
    %v235 = vpack.c.b16 %v207, %v206
    %v236 = vpack.c.b16 %v209, %v208
    %v237 = vpack.c.b16 %v211, %v210
    %v238 = vpack.c.b16 %v213, %v212
    %v239 = vpack.c.b16 %v215, %v214
    %v240 = vpack.c.b16 %v217, %v216
    %v241 = vpack.c.b16 %v219, %v218
    %v242 = vpack.c.b16 %v221, %v220
    %v243 = vpack.c.b16 %v223, %v222
    %v244 = vpack.c.b16 %v225, %v224
    %v245 = vpack.c.b16 %v227, %v226
    %v246 = vpack.c.b16 %v229, %v228
    %v247 = vpack.c.b16 %v231, %v230
    %264 = vmatprep.subr.bf16.mxu0 0
    %265 = vmatpush1.bf16.msra.mxu0 %v232
    %266 = vmatprep.subr.bf16.mxu0 0
    %267 = vmatpush1.bf16.msra.mxu0 %v233
    %268 = vmatprep.subr.bf16.mxu0 0
    %269 = vmatpush1.bf16.msra.mxu0 %v234
    %270 = vmatprep.subr.bf16.mxu0 0
    %271 = vmatpush1.bf16.msra.mxu0 %v235
    %272 = vmatprep.subr.bf16.mxu0 0
    %273 = vmatpush1.bf16.msra.mxu0 %v236
    %274 = vmatprep.subr.bf16.mxu0 0
    %275 = vmatpush1.bf16.msra.mxu0 %v237
    %276 = vmatprep.subr.bf16.mxu0 0
    %277 = vmatpush1.bf16.msra.mxu0 %v238
    %278 = vmatprep.subr.bf16.mxu0 0
    %279 = vmatpush1.bf16.msra.mxu0 %v239
    %280 = vmatprep.subr.bf16.mxu0 0
    %281 = vmatpush1.bf16.msra.mxu0 %v240
    %282 = vmatprep.subr.bf16.mxu0 0
    %283 = vmatpush1.bf16.msra.mxu0 %v241
    %284 = vmatprep.subr.bf16.mxu0 0
    %285 = vmatpush1.bf16.msra.mxu0 %v242
    %286 = vmatprep.subr.bf16.mxu0 0
    %287 = vmatpush1.bf16.msra.mxu0 %v243
    %288 = vmatprep.subr.bf16.mxu0 0
    %289 = vmatpush1.bf16.msra.mxu0 %v244
    %290 = vmatprep.subr.bf16.mxu0 0
    %291 = vmatpush1.bf16.msra.mxu0 %v245
    %292 = vmatprep.subr.bf16.mxu0 0
    %293 = vmatpush1.bf16.msra.mxu0 %v246
    %294 = vmatprep.subr.bf16.mxu0 0
    %295 = vmatpush1.bf16.msra.mxu0 %v247
    %296 = vmatprep.mubr.bf16.mxu0 %v135
    %297 = vmatmul.mubr.bf16.gmra.mrb[0].mxu0 %v134
    %v298 = vpop.f32.mrb[0].mxu0
    %v299 = vadd.f32 0.0, %v298
    %v300 = vpop.f32.mrb[0].mxu0
    %v301 = vpop.f32.mrb[0].mxu0
    %v302 = vadd.f32 0.0, %v301
    %v303 = vpop.f32.mrb[0].mxu0
    %304 = vdwg.mxu0
    %v305 = vld [vmem:[%s4] sm:$0x1]
    %v307 = vlaneseq
    %v308 = vshrl.u32 %v307, 7
    %v309 = vsub.s32 0, %v308
    %v310 = vrot.slane %v305, %v309
    %v312 = vadd.f32 %v299, %v310
    %v313 = vadd.f32 %v302, %v310
    %vm314 = vcmask 48128
    %315 = vst.msk [vmem:[%s5] sm:$0xff] %vm314, %v312
    %316 = vst.msk [vmem:[%s5 + $0x8] sm:$0xff] %vm314, %v313
    // Predicated region
    $region26: #{actor_forward.1} parent=1 // pred_check
      _
    $region27: #{actor_forward.1} parent=1 // pred_check_branch
      %318 = sbr.rel (0) target = $region29
    $region28: #{actor_forward.1} parent=1 // pred_region
      _
    $region29: #{actor_forward.1} parent=1 // pred_fallthru
      _
    // Predicated region
    $region30: #{actor_forward.1} parent=1 // pred_check
      _
    $region31: #{actor_forward.1} parent=1 // pred_check_branch
      %320 = sbr.rel (0) target = $region33
    $region32: #{actor_forward.1} parent=1 // pred_region
      _
    $region33: #{actor_forward.1} parent=1 // pred_fallthru
      _
    %321 = vsyncpa [#allocation3], 1

</llo_original>
